<compile_context>
chip_gen: v7x
topology: tpu7x:2x2x1
jax: 0.10.0
libtpu: 0.0.40
codegen_flags: <defaults>
</compile_context>

<pallas_src>
import functools

import jax
import jax.numpy as jnp
from jax.experimental import pallas as pl
from jax.experimental.pallas import tpu as pltpu


TILE_V = 128  # lane-dense vocab tile (one tile is all we ever touch)


def _mask_eos_tile_kernel(scores_ref, out_ref, *, eos_col_in_tile: int):
    # scores_ref / out_ref: (B, tile_v) view of the single tile that contains
    # the eos_token_id column. Set that one column to -inf, pass the rest through.
    col = jax.lax.broadcasted_iota(jnp.int32, scores_ref.shape, dimension=1)
    neg_inf = jnp.asarray(-jnp.inf, dtype=out_ref.dtype)
    out_ref[...] = jnp.where(col == eos_col_in_tile, neg_inf, scores_ref[...])


def min_length_logits_processor(input_ids, scores, *, min_length: int, eos_token_id: int):
    """JAX/Pallas equivalent of MinLengthLogitsProcessorTS.forward."""
    if not isinstance(min_length, int) or min_length < 0:
        raise ValueError(f"`min_length` has to be a positive integer, but is {min_length}")
    if not isinstance(eos_token_id, int) or eos_token_id < 0:
        raise ValueError(f"`eos_token_id` has to be a positive integer, but is {eos_token_id}")
    assert scores.ndim == 2, "scores must be (batch, vocab)"
    B, V = scores.shape
    assert eos_token_id < V, "eos_token_id must index into the vocab axis"

    # cur_len is a static shape property, exactly as in the PyTorch module.
    cur_len = input_ids.shape[-1]
    if cur_len >= min_length:
        # Static no-op branch: do not stream the logits through a kernel at all.
        return scores

    if V >= TILE_V and V % TILE_V == 0:
        # Fast path: touch only the 128-wide tile that holds eos_token_id.
        tile_v = TILE_V
        eos_block = eos_token_id // tile_v   # static block index along vocab axis
        eos_col = eos_token_id % tile_v      # static in-tile column
    else:
        # Fallback for vocab sizes that don't tile by 128: one full-row block
        # (block_shape equals the full array dims, so layout constraints hold).
        tile_v = V
        eos_block = 0
        eos_col = eos_token_id

    kernel = functools.partial(_mask_eos_tile_kernel, eos_col_in_tile=eos_col)

    # Single-step grid touching only the eos tile. Output aliases the input
    # buffer, so all other tiles remain the original scores (no DMA for them).
    out = pl.pallas_call(
        kernel,
        out_shape=jax.ShapeDtypeStruct((B, V), scores.dtype),
        grid=(1,),
        in_specs=[pl.BlockSpec((B, tile_v), lambda i: (0, eos_block))],
        out_specs=pl.BlockSpec((B, tile_v), lambda i: (0, eos_block)),
        input_output_aliases={0: 0},
        compiler_params=pltpu.CompilerParams(
            dimension_semantics=("arbitrary",),
        ),
    )(scores)
    return out


def _reference(input_ids, scores, *, min_length, eos_token_id):
    cur_len = input_ids.shape[-1]
    if cur_len < min_length:
        scores = scores.at[:, eos_token_id].set(-jnp.inf)
    return scores


if __name__ == "__main__":
    key = jax.random.PRNGKey(0)
    k1, k2, k3 = jax.random.split(key, 3)

    batch = 2
    vocab = 256
    seq = 8
    min_length = 10          # cur_len (8) < min_length -> EOS masked
    eos_token_id = 3         # lands in vocab tile 0

    input_ids = jax.random.randint(k1, (batch, seq), 0, vocab, dtype=jnp.int32)
    scores = jax.random.normal(k2, (batch, vocab), dtype=jnp.float32)

    # Masking branch (eos in first tile).
    out = min_length_logits_processor(
        input_ids, scores, min_length=min_length, eos_token_id=eos_token_id
    )
    out = jax.block_until_ready(out)
    ref = _reference(input_ids, scores, min_length=min_length, eos_token_id=eos_token_id)
    assert jnp.array_equal(out, ref), "mismatch vs reference (eos in tile 0)"

    # Masking branch with eos in a later tile (exercises the static block index).
    eos2 = 200  # tile 1, in-tile column 72
    out_b = min_length_logits_processor(
        input_ids, scores, min_length=min_length, eos_token_id=eos2
    )
    out_b = jax.block_until_ready(out_b)
    ref_b = _reference(input_ids, scores, min_length=min_length, eos_token_id=eos2)
    assert jnp.array_equal(out_b, ref_b), "mismatch vs reference (eos in tile 1)"

    # No-op branch (cur_len >= min_length): scores returned unchanged, no kernel.
    out2 = min_length_logits_processor(
        input_ids, scores, min_length=4, eos_token_id=eos_token_id
    )
    out2 = jax.block_until_ready(out2)
    assert jnp.array_equal(out2, scores), "no-op branch mismatch"

    # Odd vocab size (not a multiple of 128): exercises the full-row fallback.
    vocab_odd = 200
    scores_odd = jax.random.normal(k3, (batch, vocab_odd), dtype=jnp.float32)
    eos_odd = 150
    out_c = min_length_logits_processor(
        input_ids, scores_odd, min_length=min_length, eos_token_id=eos_odd
    )
    out_c = jax.block_until_ready(out_c)
    ref_c = _reference(input_ids, scores_odd, min_length=min_length, eos_token_id=eos_odd)
    assert jnp.array_equal(out_c, ref_c), "mismatch vs reference (odd vocab fallback)"

    print("KERNEL_OK")
</pallas_src>

<mosaic_0001>
module attributes {stable_mosaic.version = 11 : i64} {
  func.func @_mask_eos_tile_kernel(%arg0: i32, %arg1: memref<2x128xf32, #tpu.memory_space<vmem>>, %arg2: memref<2x128xf32, #tpu.memory_space<vmem>>) attributes {dimension_semantics = [#tpu.dimension_semantics<arbitrary>], iteration_bounds = array<i64: 1>, scalar_prefetch = 0 : i64, scratch_operands = 0 : i64, tpu.core_type = #tpu.core_type<tc>, window_params = [{transform_indices = @transform_0, window_bounds = array<i64: 2, 128>}, {transform_indices = @transform_1, window_bounds = array<i64: 2, 128>}]} {
    %0 = tpu.iota {dimensions = array<i32: 1>} : vector<2x128xi32>
    %c3_i32 = arith.constant 3 : i32
    %1 = vector.broadcast %c3_i32 : i32 to vector<2x128xi32>
    %2 = arith.cmpi eq, %0, %1 : vector<2x128xi32>
    %c0 = arith.constant 0 : index
    %c0_0 = arith.constant 0 : index
    %3 = vector.load %arg1[%c0, %c0_0] : memref<2x128xf32, #tpu.memory_space<vmem>>, vector<2x128xf32>
    %cst = arith.constant 0xFF800000 : f32
    %4 = vector.broadcast %cst : f32 to vector<2x128xf32>
    %5 = arith.select %2, %4, %3 : vector<2x128xi1>, vector<2x128xf32>
    %c0_1 = arith.constant 0 : index
    %c0_2 = arith.constant 0 : index
    %6 = vector.load %arg2[%c0_1, %c0_2] : memref<2x128xf32, #tpu.memory_space<vmem>>, vector<2x128xf32>
    tpu.vector_store %arg2[%c0_1, %c0_2], %5 {strides = array<i32>} : memref<2x128xf32, #tpu.memory_space<vmem>>, vector<2x128xf32>,
    return
  }
  func.func @transform_0(%arg0: i32) -> (i32, i32) {
    %c0_i32 = arith.constant 0 : i32
    %c0_i32_0 = arith.constant 0 : i32
    %c0_i32_1 = arith.constant 0 : i32
    return %c0_i32, %c0_i32_0 : i32, i32
  }
  func.func @transform_1(%arg0: i32) -> (i32, i32) {
    %c0_i32 = arith.constant 0 : i32
    %c0_i32_0 = arith.constant 0 : i32
    %c0_i32_1 = arith.constant 0 : i32
    return %c0_i32, %c0_i32_0 : i32, i32
  }
}

</mosaic_0001>

<llo_original>
// kernel: tpu_custom_call.1
$region0: #{tpu_custom_call.1}
  #allocation0 [shape = 'u32[]', space=smem, size = 0x4, offset = 0x4, fixed_abs, tag = 'smem constant byte address 0x4 - core index']
  #allocation1 [shape = 'u32[144,128]{1,0:T(1,128)}', space=vmem, size = 0x12000, scoped, tag = 'internal scratch']
  %s0 = inlined_call_operand.hbm [shape: f32[2,256], index: 0, kind: input, shape index: {}, may-alias: {0,1}]
  %s1 = inlined_call_operand.hbm [shape: f32[2,256], index: 1, kind: output, shape index: {}, may-alias: {0,1}]
  %s2 = sld [smem:[#allocation0]]
  $region18: #{tpu_custom_call.1} parent=0
    _
  %s4 = ssub.s32 1, %s2
  %s5 = scalar_select 0, %s4, %s2
  $region1: #{tpu_custom_call.1} parent=0
    #allocation2 [shape = 'u8[1024]{0}', space=vmem, size = 0x400, scoped, tag = 'input window, operand 0, single buffered']
    #allocation3 [shape = 's32[1]{0}', space=sflag, size = 0x4, scoped, tag = 'scoped memory for tpu_custom_call.1']
    #allocation4 [shape = 's32[1]{0}', space=sflag, size = 0x4, scoped, tag = 'scoped memory for tpu_custom_call.1']
    #allocation5 [shape = 'u8[1024]{0}', space=vmem, size = 0x400, scoped, tag = 'output window, operand 0, single buffered']
    %6 = vsyncpa [#allocation3], 0
    %7 = vsyncpa [#allocation4], 0
    // Predicated region
    $region2: #{tpu_custom_call.1} parent=1 // pred_check
      _
    $region3: #{tpu_custom_call.1} parent=1 // pred_check_branch
      %9 = sbr.rel (0) target = $region5
    $region4: #{tpu_custom_call.1} parent=1 // pred_region
      %s11 = ssub.s32 32, 32
      %12 = vsyncadd [#allocation3], %s11
      %s14 = sshll.u32 [#allocation2], 4
      %s15 = int_to_ptr.vmem [resolvable:$true] %s14
      %17 = dma.hbm_to_vmem [thread:$0]  %s0, 32, %s15, [#allocation3]
    $region5: #{tpu_custom_call.1} parent=1 // pred_fallthru
      _
    // Predicated region
    $region6: #{tpu_custom_call.1} parent=1 // pred_check
      _
    $region7: #{tpu_custom_call.1} parent=1 // pred_check_branch
      %19 = sbr.rel (0) target = $region9
    $region8: #{tpu_custom_call.1} parent=1 // pred_region
      %20 = dma.done [#allocation3], 32
    $region9: #{tpu_custom_call.1} parent=1 // pred_fallthru
      _
    %v21 = vlaneseq
    %v22 = vand.u32 %v21, 127
    %vm23 = vcmp.eq.s32.totalorder %v22, 3
    %v24 = vld [vmem:[#allocation2] sm:$0x3]
    %v25 = vsel %vm23, -inf, %v24
    %26 = vst [vmem:[#allocation5] sm:$0x3] %v25
    // Predicated region
    $region10: #{tpu_custom_call.1} parent=1 // pred_check
      _
    $region11: #{tpu_custom_call.1} parent=1 // pred_check_branch
      %28 = sbr.rel (0) target = $region13
    $region12: #{tpu_custom_call.1} parent=1 // pred_region
      %s30 = ssub.s32 32, 32
      %31 = vsyncadd [#allocation4], %s30
      %s33 = sshll.u32 [#allocation5], 4
      %s34 = int_to_ptr.vmem [resolvable:$true] %s33
      %36 = dma.vmem_to_hbm [thread:$0]  %s34, 32, %s1, [#allocation4]
    $region13: #{tpu_custom_call.1} parent=1 // pred_fallthru
      _
    // Predicated region
    $region14: #{tpu_custom_call.1} parent=1 // pred_check
      _
    $region15: #{tpu_custom_call.1} parent=1 // pred_check_branch
      %38 = sbr.rel (0) target = $region17
    $region16: #{tpu_custom_call.1} parent=1 // pred_region
      %39 = dma.done [#allocation4], 32
    $region17: #{tpu_custom_call.1} parent=1 // pred_fallthru
      _
    %40 = vsyncpa [#allocation3], 1
    %41 = vsyncpa [#allocation4], 1

</llo_original>
